<compile_context>
chip_gen: v5e
topology: v5e:2x2
jax: 0.10.0
libtpu: 0.0.40
codegen_flags: <defaults>
</compile_context>

<pallas_src>
import jax
import jax.numpy as jnp
from jax.experimental import pallas as pl
from jax.experimental.pallas import tpu as pltpu


def mlp_kernel(x_ref, w1_ref, b1_ref, w2_ref, b2_ref, w3_ref, b3_ref, o_ref):
    # x tile: (TB, 11) f32 straight from HBM; cast to bf16 here so the three
    # matmuls take the bf16 MXU path.  All dots accumulate in f32
    # (preferred_element_type); bias add + ReLU run in f32 on the VPU
    # (v5e's VPU has no bf16).
    x = x_ref[...].astype(jnp.bfloat16)
    h1 = jnp.dot(x, w1_ref[...], preferred_element_type=jnp.float32)
    h1 = jnp.maximum(h1 + b1_ref[...], 0.0)                       # (TB, 64) f32
    h2 = jnp.dot(h1.astype(jnp.bfloat16), w2_ref[...],
                 preferred_element_type=jnp.float32)
    h2 = jnp.maximum(h2 + b2_ref[...], 0.0)                       # (TB, 64) f32
    o = jnp.dot(h2.astype(jnp.bfloat16), w3_ref[...],
                preferred_element_type=jnp.float32)
    o_ref[...] = (o + b3_ref[...]).astype(o_ref.dtype)            # (TB, 4)


def _cdiv(a, b):
    return -(-a // b)


def _round_up(a, m):
    return _cdiv(a, m) * m


# Conservative per-row VMEM estimate (bytes), used to size the batch tile:
#   x block   (TB, 11) f32, lane-padded to 128 ->  512 B/row, x2 double-buffered
#   out block (TB,  4) f32, lane-padded to 128 ->  512 B/row, x2 double-buffered
#   in-kernel live temporaries (x_bf16, h1/h2 f32+bf16, o) -> ~1.5-2 KiB/row peak
_BYTES_PER_ROW = 4096


def _vmem_budget_bytes():
    """~75% of the detected VMEM capacity (48 MiB on v7x, 96 MiB on v5e/v6e)."""
    cap = 64 * 1024 * 1024  # conservative fallback = v7x per-core VMEM
    try:
        info = pltpu.get_tpu_info()
        c = getattr(info, "vmem_capacity_bytes", None)
        if c:
            cap = int(c)
    except Exception:
        pass
    return (cap * 3) // 4


def multiclass_forward(x, params, *, tile_b=None, out_dtype=jnp.float32):
    """x: (B, 11) float32.  params: PyTorch-convention (out_features, in_features) weights."""
    B, F = x.shape
    assert F == 11

    # Weights pre-transposed to (in, out) and cast to bf16 for the MXU (tiny,
    # VMEM-resident arrays -> negligible wrapper cost); biases as 2-D f32 rows
    # so they broadcast over the batch inside the kernel.
    w1 = params["w1"].T.astype(jnp.bfloat16)                # (11, 64)
    b1 = params["b1"].reshape(1, -1).astype(jnp.float32)    # (1, 64)
    w2 = params["w2"].T.astype(jnp.bfloat16)                # (64, 64)
    b2 = params["b2"].reshape(1, -1).astype(jnp.float32)    # (1, 64)
    w3 = params["w3"].T.astype(jnp.bfloat16)                # (64, 4)
    b3 = params["b3"].reshape(1, -1).astype(jnp.float32)    # (1, 4)

    # --- batch tile sizing -------------------------------------------------
    budget = _vmem_budget_bytes()
    tb_cap = max(8, min(32768, (budget // _BYTES_PER_ROW) // 8 * 8))
    if tile_b is not None:
        tb_cap = max(8, min(tb_cap, _round_up(int(tile_b), 8)))

    if B <= 8:
        TB = B  # single exact block (block dims == array dims are always legal)
    else:
        # keep >= 2 grid steps so v7x's two TensorCores both get work
        TB = max(8, min(tb_cap, _round_up(_cdiv(B, 2), 8)))
    n_tiles = _cdiv(B, TB)
    # Non-divisible remainders are handled by Pallas partial-block masking; no
    # padding of x and no out[:B] slice needed.

    resident = lambda shape: pl.BlockSpec(shape, lambda i: (0, 0))

    out = pl.pallas_call(
        mlp_kernel,
        out_shape=jax.ShapeDtypeStruct((B, 4), out_dtype),
        grid=(n_tiles,),
        in_specs=[
            pl.BlockSpec((TB, 11), lambda i: (i, 0)),   # x: streamed over batch
            resident(w1.shape),
            resident(b1.shape),
            resident(w2.shape),
            resident(b2.shape),
            resident(w3.shape),
            resident(b3.shape),
        ],
        out_specs=pl.BlockSpec((TB, 4), lambda i: (i, 0)),
        compiler_params=pltpu.CompilerParams(
            dimension_semantics=("parallel",),          # dual-TC split on v7x
            vmem_limit_bytes=int(budget),
        ),
    )(x, w1, b1, w2, b2, w3, b3)
    return out


def init_params(key):
    """Deterministic init matching nn.Linear shapes (out_features, in_features)."""
    k1, k2, k3, k4, k5, k6 = jax.random.split(key, 6)

    def linear(kw, kb, fan_in, fan_out):
        bound = 1.0 / jnp.sqrt(fan_in)
        w = jax.random.uniform(kw, (fan_out, fan_in), jnp.float32, -bound, bound)
        b = jax.random.uniform(kb, (fan_out,), jnp.float32, -bound, bound)
        return w, b

    w1, b1 = linear(k1, k2, 11, 64)
    w2, b2 = linear(k3, k4, 64, 64)
    w3, b3 = linear(k5, k6, 64, 4)
    return {"w1": w1, "b1": b1, "w2": w2, "b2": b2, "w3": w3, "b3": b3}


def reference_forward(x, p):
    h1 = jnp.maximum(x @ p["w1"].T + p["b1"], 0.0)
    h2 = jnp.maximum(h1 @ p["w2"].T + p["b2"], 0.0)
    return h2 @ p["w3"].T + p["b3"]


if __name__ == "__main__":
    key = jax.random.PRNGKey(0)
    kx, kp = jax.random.split(key)
    params = init_params(kp)

    # Small shape consistent with the module: batch=8, 11 features, 4 classes.
    B = 8
    x = jax.random.normal(kx, (B, 11), jnp.float32)
    out = jax.block_until_ready(multiclass_forward(x, params))
    ref = reference_forward(x, params)
    assert out.shape == (B, 4)
    # bf16 matmul inputs with f32 accumulation -> relaxed tolerance vs f32 reference.
    assert jnp.allclose(out, ref, atol=5e-2, rtol=5e-2), "mismatch vs pure-JAX reference"

    # Multi-tile grid + Pallas partial-block masking (B % TB != 0, no padding).
    x2 = jax.random.normal(kx, (300, 11), jnp.float32)
    out2 = jax.block_until_ready(multiclass_forward(x2, params, tile_b=128))
    ref2 = reference_forward(x2, params)
    assert out2.shape == (300, 4)
    assert jnp.allclose(out2, ref2, atol=5e-2, rtol=5e-2), "mismatch on tiled batch"

    # Auto (VMEM-budget) tile path: TB = ceil(B/2) rounded to 8 -> 2 grid steps.
    out3 = jax.block_until_ready(multiclass_forward(x2, params))
    assert out3.shape == (300, 4)
    assert jnp.allclose(out3, ref2, atol=5e-2, rtol=5e-2), "mismatch on auto-tiled batch"

    print("KERNEL_OK")
</pallas_src>

<mosaic_0001>
module attributes {stable_mosaic.version = 11 : i64} {
  func.func @mlp_kernel(%arg0: i32, %arg1: memref<8x11xf32, #tpu.memory_space<vmem>>, %arg2: memref<11x64xbf16, #tpu.memory_space<vmem>>, %arg3: memref<1x64xf32, #tpu.memory_space<vmem>>, %arg4: memref<64x64xbf16, #tpu.memory_space<vmem>>, %arg5: memref<1x64xf32, #tpu.memory_space<vmem>>, %arg6: memref<64x4xbf16, #tpu.memory_space<vmem>>, %arg7: memref<1x4xf32, #tpu.memory_space<vmem>>, %arg8: memref<8x4xf32, #tpu.memory_space<vmem>>) attributes {dimension_semantics = [#tpu.dimension_semantics<parallel>], iteration_bounds = array<i64: 1>, scalar_prefetch = 0 : i64, scratch_operands = 0 : i64, tpu.core_type = #tpu.core_type<tc>, window_params = [{transform_indices = @transform_0, window_bounds = array<i64: 8, 11>}, {pipeline_mode = #tpu.pipeline_mode<synchronous>, transform_indices = @transform_1, window_bounds = array<i64: 11, 64>}, {pipeline_mode = #tpu.pipeline_mode<synchronous>, transform_indices = @transform_2, window_bounds = array<i64: 1, 64>}, {pipeline_mode = #tpu.pipeline_mode<synchronous>, transform_indices = @transform_3, window_bounds = array<i64: 64, 64>}, {pipeline_mode = #tpu.pipeline_mode<synchronous>, transform_indices = @transform_4, window_bounds = array<i64: 1, 64>}, {pipeline_mode = #tpu.pipeline_mode<synchronous>, transform_indices = @transform_5, window_bounds = array<i64: 64, 4>}, {pipeline_mode = #tpu.pipeline_mode<synchronous>, transform_indices = @transform_6, window_bounds = array<i64: 1, 4>}, {transform_indices = @transform_7, window_bounds = array<i64: 8, 4>}]} {
    %c0 = arith.constant 0 : index
    %c0_0 = arith.constant 0 : index
    %0 = vector.load %arg1[%c0, %c0_0] : memref<8x11xf32, #tpu.memory_space<vmem>>, vector<8x11xf32>
    %1 = arith.truncf %0 : vector<8x11xf32> to vector<8x11xbf16>
    %c0_1 = arith.constant 0 : index
    %c0_2 = arith.constant 0 : index
    %2 = vector.load %arg2[%c0_1, %c0_2] : memref<11x64xbf16, #tpu.memory_space<vmem>>, vector<11x64xbf16>
    %cst = arith.constant dense<0.000000e+00> : vector<8x64xf32>
    %3 = tpu.matmul %1, %2, %cst {dimension_numbers = #tpu.dot_dimension_numbers<[1], [0], [0], [1], [0, 0, 1, 1], [], []>} : vector<8x11xbf16>, vector<11x64xbf16>, vector<8x64xf32> -> vector<8x64xf32>
    %c0_3 = arith.constant 0 : index
    %c0_4 = arith.constant 0 : index
    %4 = vector.load %arg3[%c0_3, %c0_4] : memref<1x64xf32, #tpu.memory_space<vmem>>, vector<1x64xf32>
    %5 = vector.broadcast %4 : vector<1x64xf32> to vector<8x64xf32>
    %6 = arith.addf %3, %5 : vector<8x64xf32>
    %cst_5 = arith.constant 0.000000e+00 : f32
    %7 = vector.broadcast %cst_5 : f32 to vector<8x64xf32>
    %8 = arith.maximumf %6, %7 : vector<8x64xf32>
    %9 = arith.truncf %8 : vector<8x64xf32> to vector<8x64xbf16>
    %c0_6 = arith.constant 0 : index
    %c0_7 = arith.constant 0 : index
    %10 = vector.load %arg4[%c0_6, %c0_7] : memref<64x64xbf16, #tpu.memory_space<vmem>>, vector<64x64xbf16>
    %cst_8 = arith.constant dense<0.000000e+00> : vector<8x64xf32>
    %11 = tpu.matmul %9, %10, %cst_8 {dimension_numbers = #tpu.dot_dimension_numbers<[1], [0], [0], [1], [0, 0, 1, 1], [], []>} : vector<8x64xbf16>, vector<64x64xbf16>, vector<8x64xf32> -> vector<8x64xf32>
    %c0_9 = arith.constant 0 : index
    %c0_10 = arith.constant 0 : index
    %12 = vector.load %arg5[%c0_9, %c0_10] : memref<1x64xf32, #tpu.memory_space<vmem>>, vector<1x64xf32>
    %13 = vector.broadcast %12 : vector<1x64xf32> to vector<8x64xf32>
    %14 = arith.addf %11, %13 : vector<8x64xf32>
    %cst_11 = arith.constant 0.000000e+00 : f32
    %15 = vector.broadcast %cst_11 : f32 to vector<8x64xf32>
    %16 = arith.maximumf %14, %15 : vector<8x64xf32>
    %17 = arith.truncf %16 : vector<8x64xf32> to vector<8x64xbf16>
    %c0_12 = arith.constant 0 : index
    %c0_13 = arith.constant 0 : index
    %18 = vector.load %arg6[%c0_12, %c0_13] : memref<64x4xbf16, #tpu.memory_space<vmem>>, vector<64x4xbf16>
    %cst_14 = arith.constant dense<0.000000e+00> : vector<8x4xf32>
    %19 = tpu.matmul %17, %18, %cst_14 {dimension_numbers = #tpu.dot_dimension_numbers<[1], [0], [0], [1], [0, 0, 1, 1], [], []>} : vector<8x64xbf16>, vector<64x4xbf16>, vector<8x4xf32> -> vector<8x4xf32>
    %c0_15 = arith.constant 0 : index
    %c0_16 = arith.constant 0 : index
    %20 = vector.load %arg7[%c0_15, %c0_16] : memref<1x4xf32, #tpu.memory_space<vmem>>, vector<1x4xf32>
    %21 = vector.broadcast %20 : vector<1x4xf32> to vector<8x4xf32>
    %22 = arith.addf %19, %21 : vector<8x4xf32>
    %c0_17 = arith.constant 0 : index
    %c0_18 = arith.constant 0 : index
    %23 = vector.load %arg8[%c0_17, %c0_18] : memref<8x4xf32, #tpu.memory_space<vmem>>, vector<8x4xf32>
    tpu.vector_store %arg8[%c0_17, %c0_18], %22 {strides = array<i32>} : memref<8x4xf32, #tpu.memory_space<vmem>>, vector<8x4xf32>,
    return
  }
  func.func @transform_0(%arg0: i32) -> (i32, i32) {
    %c0_i32 = arith.constant 0 : i32
    %c0_i32_0 = arith.constant 0 : i32
    return %arg0, %c0_i32 : i32, i32
  }
  func.func @transform_1(%arg0: i32) -> (i32, i32) {
    %c0_i32 = arith.constant 0 : i32
    %c0_i32_0 = arith.constant 0 : i32
    %c0_i32_1 = arith.constant 0 : i32
    return %c0_i32, %c0_i32_0 : i32, i32
  }
  func.func @transform_2(%arg0: i32) -> (i32, i32) {
    %c0_i32 = arith.constant 0 : i32
    %c0_i32_0 = arith.constant 0 : i32
    %c0_i32_1 = arith.constant 0 : i32
    return %c0_i32, %c0_i32_0 : i32, i32
  }
  func.func @transform_3(%arg0: i32) -> (i32, i32) {
    %c0_i32 = arith.constant 0 : i32
    %c0_i32_0 = arith.constant 0 : i32
    %c0_i32_1 = arith.constant 0 : i32
    return %c0_i32, %c0_i32_0 : i32, i32
  }
  func.func @transform_4(%arg0: i32) -> (i32, i32) {
    %c0_i32 = arith.constant 0 : i32
    %c0_i32_0 = arith.constant 0 : i32
    %c0_i32_1 = arith.constant 0 : i32
    return %c0_i32, %c0_i32_0 : i32, i32
  }
  func.func @transform_5(%arg0: i32) -> (i32, i32) {
    %c0_i32 = arith.constant 0 : i32
    %c0_i32_0 = arith.constant 0 : i32
    %c0_i32_1 = arith.constant 0 : i32
    return %c0_i32, %c0_i32_0 : i32, i32
  }
  func.func @transform_6(%arg0: i32) -> (i32, i32) {
    %c0_i32 = arith.constant 0 : i32
    %c0_i32_0 = arith.constant 0 : i32
    %c0_i32_1 = arith.constant 0 : i32
    return %c0_i32, %c0_i32_0 : i32, i32
  }
  func.func @transform_7(%arg0: i32) -> (i32, i32) {
    %c0_i32 = arith.constant 0 : i32
    %c0_i32_0 = arith.constant 0 : i32
    return %arg0, %c0_i32 : i32, i32
  }
}

</mosaic_0001>

<llo_original>
// kernel: tpu_custom_call.1
$region0: #{tpu_custom_call.1}
  #allocation0 [shape = 'u32[]', space=smem, size = 0x4, offset = 0x4, fixed_abs, tag = 'smem constant byte address 0x4 - core index']
  #allocation1 [shape = 'u32[72,128]{1,0:T(1,128)}', space=vmem, size = 0x9000, scoped, tag = 'internal scratch']
  %s0 = inlined_call_operand.hbm [shape: f32[8,11], index: 0, kind: input, shape index: {}]
  %s1 = inlined_call_operand.hbm [shape: bf16[11,64], index: 1, kind: input, shape index: {}]
  %s2 = inlined_call_operand.vmem [shape: f32[1,64], index: 2, kind: input, shape index: {}]
  %s3 = inlined_call_operand.vmem [shape: bf16[64,64], index: 3, kind: input, shape index: {}]
  %s4 = inlined_call_operand.vmem [shape: f32[1,64], index: 4, kind: input, shape index: {}]
  %s5 = inlined_call_operand.vmem [shape: bf16[64,4], index: 5, kind: input, shape index: {}]
  %s6 = inlined_call_operand.vmem [shape: f32[1,4], index: 6, kind: input, shape index: {}]
  %s7 = inlined_call_operand.vmem [shape: f32[8,4], index: 7, kind: output, shape index: {}]
  %s8 = sld [smem:[#allocation0]]
  $region46: #{tpu_custom_call.1} parent=0
    _
  %s10 = ssub.s32 1, %s8
  %s11 = scalar_select 0, %s10, %s8
  $region1: #{tpu_custom_call.1} parent=0
    #allocation2 [shape = 'u8[4096]{0}', space=vmem, size = 0x1000, scoped, tag = 'input window, operand 0, single buffered']
    #allocation3 [shape = 's32[1]{0}', space=sflag, size = 0x4, scoped, tag = 'scoped memory for tpu_custom_call.1']
    #allocation4 [shape = 'u8[4096]{0}', space=vmem, size = 0x1000, scoped, tag = 'input window, operand 1, single buffered']
    #allocation5 [shape = 's32[1]{0}', space=sflag, size = 0x4, scoped, tag = 'scoped memory for tpu_custom_call.1']
    %12 = vsyncpa [#allocation3], 0
    %13 = vsyncpa [#allocation5], 0
    // Predicated region
    $region2: #{tpu_custom_call.1} parent=1 // pred_check
      _
    $region3: #{tpu_custom_call.1} parent=1 // pred_check_branch
      %15 = sbr.rel (0) target = $region5
    $region4: #{tpu_custom_call.1} parent=1 // pred_region
      %17 = vsyncadd [#allocation3], 0
      %s19 = sshll.u32 %s0, 4
      %s20 = int_to_ptr.hbm [resolvable:$true] %s19
      %s21 = sshll.u32 [#allocation2], 4
      %s22 = int_to_ptr.vmem [resolvable:$true] %s21
      %24 = dma.hbm_to_vmem [thread:$0]  %s20, 128, %s22, [#allocation3]
    $region5: #{tpu_custom_call.1} parent=1 // pred_fallthru
      _
    // Predicated region
    $region6: #{tpu_custom_call.1} parent=1 // pred_check
      _
    $region7: #{tpu_custom_call.1} parent=1 // pred_check_branch
      %26 = sbr.rel (0) target = $region9
    $region8: #{tpu_custom_call.1} parent=1 // pred_region
      %28 = vsyncadd [#allocation5], 0
      %s29 = sshll.u32 %s1, 4
      %s30 = int_to_ptr.hbm [resolvable:$true] %s29
      %s31 = sshll.u32 [#allocation4], 4
      %s32 = int_to_ptr.vmem [resolvable:$true] %s31
      %37 = dma.hbm_to_vmem [thread:$0]  %s30, 128, %s32, [#allocation5], 64, 64, 4
    $region9: #{tpu_custom_call.1} parent=1 // pred_fallthru
      _
    // Predicated region
    $region10: #{tpu_custom_call.1} parent=1 // pred_check
      _
    $region11: #{tpu_custom_call.1} parent=1 // pred_check_branch
      %39 = sbr.rel (0) target = $region13
    $region12: #{tpu_custom_call.1} parent=1 // pred_region
      _
    $region13: #{tpu_custom_call.1} parent=1 // pred_fallthru
      _
    // Predicated region
    $region14: #{tpu_custom_call.1} parent=1 // pred_check
      _
    $region15: #{tpu_custom_call.1} parent=1 // pred_check_branch
      %41 = sbr.rel (0) target = $region17
    $region16: #{tpu_custom_call.1} parent=1 // pred_region
      _
    $region17: #{tpu_custom_call.1} parent=1 // pred_fallthru
      _
    // Predicated region
    $region18: #{tpu_custom_call.1} parent=1 // pred_check
      _
    $region19: #{tpu_custom_call.1} parent=1 // pred_check_branch
      %43 = sbr.rel (0) target = $region21
    $region20: #{tpu_custom_call.1} parent=1 // pred_region
      _
    $region21: #{tpu_custom_call.1} parent=1 // pred_fallthru
      _
    // Predicated region
    $region22: #{tpu_custom_call.1} parent=1 // pred_check
      _
    $region23: #{tpu_custom_call.1} parent=1 // pred_check_branch
      %45 = sbr.rel (0) target = $region25
    $region24: #{tpu_custom_call.1} parent=1 // pred_region
      _
    $region25: #{tpu_custom_call.1} parent=1 // pred_fallthru
      _
    // Predicated region
    $region26: #{tpu_custom_call.1} parent=1 // pred_check
      _
    $region27: #{tpu_custom_call.1} parent=1 // pred_check_branch
      %47 = sbr.rel (0) target = $region29
    $region28: #{tpu_custom_call.1} parent=1 // pred_region
      _
    $region29: #{tpu_custom_call.1} parent=1 // pred_fallthru
      _
    // Predicated region
    $region30: #{tpu_custom_call.1} parent=1 // pred_check
      _
    $region31: #{tpu_custom_call.1} parent=1 // pred_check_branch
      %49 = sbr.rel (0) target = $region33
    $region32: #{tpu_custom_call.1} parent=1 // pred_region
      %51 = dma.done [#allocation3], 128
    $region33: #{tpu_custom_call.1} parent=1 // pred_fallthru
      _
    // Predicated region
    $region34: #{tpu_custom_call.1} parent=1 // pred_check
      _
    $region35: #{tpu_custom_call.1} parent=1 // pred_check_branch
      %53 = sbr.rel (0) target = $region37
    $region36: #{tpu_custom_call.1} parent=1 // pred_region
      %55 = dma.done [#allocation5], 128
    $region37: #{tpu_custom_call.1} parent=1 // pred_fallthru
      _
    %v57 = vld [vmem:[#allocation2] sm:$0xff]
    %v58 = vpack.c.bf16 %v57, %v57
    %v59 = vld [vmem:[#allocation4] sm:$0xf]
    %v60 = vld [vmem:[#allocation4 + $0x4] sm:$0x3]
    %v61 = vld [vmem:[%s2] sm:$0x1]
    %v63 = vperm.slane %v61, 0
    %v67 = vunpack.c.l.b16 %v59
    %v68 = vunpack.c.l.b16 %v60
    %v69 = vpack.c.b16 %v68, %v67
    %vm70 = vcmask 89088
    %v72 = vsel %vm70, %v58, 0
    %vm74 = vcmask 1044480
    %vm75 = vcmask 1045504
    %v76 = vsel %vm74, 4294967295, 65535
    %v77 = vsel %vm75, %v76, 0
    %v79 = vand.u32 %v69, %v77
    %81 = vmatpush.bf16.msra.mxu0 0
    %82 = vmatpush.bf16.msra.mxu0 0
    %83 = vmatpush.bf16.msra.mxu0 0
    %84 = vmatpush.bf16.msra.mxu0 0
    %85 = vmatpush.bf16.msra.mxu0 0
    %86 = vmatpush.bf16.msra.mxu0 0
    %87 = vmatpush.bf16.msra.mxu0 0
    %88 = vmatpush.bf16.msra.mxu0 %v79
    %89 = vmatmul.bf16.gmra.mxu0 %v72
    %v90 = vpop.f32.mrf.mxu0
    %v91 = vadd.f32 %v63, %v90
    %v92 = vpop.f32.mrf.mxu0
    %93 = vdwg.mxu0
    %v94 = vmax.f32 %v91, 0.0
    %v95 = vpack.c.bf16 %v94, %v94
    %v96 = vld [vmem:[%s3] sm:$0xf]
    %v97 = vld [vmem:[%s3 + $0x4] sm:$0xf]
    %v98 = vld [vmem:[%s3 + $0x8] sm:$0xf]
    %v99 = vld [vmem:[%s3 + $0xc] sm:$0xf]
    %v100 = vld [vmem:[%s3 + $0x10] sm:$0xf]
    %v101 = vld [vmem:[%s3 + $0x14] sm:$0xf]
    %v102 = vld [vmem:[%s3 + $0x18] sm:$0xf]
    %v103 = vld [vmem:[%s3 + $0x1c] sm:$0xf]
    %v104 = vld [vmem:[%s4] sm:$0x1]
    %v106 = vperm.slane %v104, 0
    %v116 = vunpack.c.l.b16 %v96
    %v117 = vunpack.c.l.b16 %v97
    %v118 = vunpack.c.l.b16 %v98
    %v119 = vunpack.c.l.b16 %v99
    %v120 = vunpack.c.l.b16 %v100
    %v121 = vunpack.c.l.b16 %v101
    %v122 = vunpack.c.l.b16 %v102
    %v123 = vunpack.c.l.b16 %v103
    %v124 = vpack.c.b16 %v117, %v116
    %v125 = vpack.c.b16 %v119, %v118
    %v126 = vpack.c.b16 %v121, %v120
    %v127 = vpack.c.b16 %v123, %v122
    %vm132 = vcmask 523264
    %v134 = vsel %vm132, %v95, 0
    %136 = vmatpush.bf16.msra.mxu0 0
    %137 = vmatpush.bf16.msra.mxu0 0
    %138 = vmatpush.bf16.msra.mxu0 0
    %139 = vmatpush.bf16.msra.mxu0 0
    %140 = vmatpush.bf16.msra.mxu0 %v127
    %141 = vmatpush.bf16.msra.mxu0 %v126
    %142 = vmatpush.bf16.msra.mxu0 %v125
    %143 = vmatpush.bf16.msra.mxu0 %v124
    %144 = vmatmul.bf16.gmra.mxu0 %v134
    %v145 = vpop.f32.mrf.mxu0
    %v146 = vadd.f32 %v106, %v145
    %v147 = vpop.f32.mrf.mxu0
    %148 = vdwg.mxu0
    %v149 = vmax.f32 %v146, 0.0
    %v150 = vpack.c.bf16 %v149, %v149
    %v151 = vld [vmem:[%s5] sm:$0xf]
    %v152 = vld [vmem:[%s5 + $0x4] sm:$0xf]
    %v153 = vld [vmem:[%s5 + $0x8] sm:$0xf]
    %v154 = vld [vmem:[%s5 + $0xc] sm:$0xf]
    %v155 = vld [vmem:[%s5 + $0x10] sm:$0xf]
    %v156 = vld [vmem:[%s5 + $0x14] sm:$0xf]
    %v157 = vld [vmem:[%s5 + $0x18] sm:$0xf]
    %v158 = vld [vmem:[%s5 + $0x1c] sm:$0xf]
    %v159 = vld [vmem:[%s6] sm:$0x1]
    %v161 = vperm.slane %v159, 0
    %v171 = vunpack.c.l.b16 %v151
    %v172 = vunpack.c.l.b16 %v152
    %v173 = vunpack.c.l.b16 %v153
    %v174 = vunpack.c.l.b16 %v154
    %v175 = vunpack.c.l.b16 %v155
    %v176 = vunpack.c.l.b16 %v156
    %v177 = vunpack.c.l.b16 %v157
    %v178 = vunpack.c.l.b16 %v158
    %v179 = vpack.c.b16 %v172, %v171
    %v180 = vpack.c.b16 %v174, %v173
    %v181 = vpack.c.b16 %v176, %v175
    %v182 = vpack.c.b16 %v178, %v177
    %v188 = vsel %vm132, %v150, 0
    %190 = vmatpush.bf16.msra.mxu0 0
    %191 = vmatpush.bf16.msra.mxu0 0
    %192 = vmatpush.bf16.msra.mxu0 0
    %193 = vmatpush.bf16.msra.mxu0 0
    %194 = vmatpush.bf16.msra.mxu0 %v182
    %195 = vmatpush.bf16.msra.mxu0 %v181
    %196 = vmatpush.bf16.msra.mxu0 %v180
    %197 = vmatpush.bf16.msra.mxu0 %v179
    %198 = vmatmul.bf16.gmra.mxu0 %v188
    %v199 = vpop.f32.mrf.mxu0
    %v200 = vadd.f32 %v161, %v199
    %v201 = vpop.f32.mrf.mxu0
    %202 = vdwg.mxu0
    %vm203 = vcmask 31744
    %204 = vst.msk [vmem:[%s7] sm:$0xff] %vm203, %v200
    // Predicated region
    $region38: #{tpu_custom_call.1} parent=1 // pred_check
      _
    $region39: #{tpu_custom_call.1} parent=1 // pred_check_branch
      %206 = sbr.rel (0) target = $region41
    $region40: #{tpu_custom_call.1} parent=1 // pred_region
      _
    $region41: #{tpu_custom_call.1} parent=1 // pred_fallthru
      _
    // Predicated region
    $region42: #{tpu_custom_call.1} parent=1 // pred_check
      _
    $region43: #{tpu_custom_call.1} parent=1 // pred_check_branch
      %208 = sbr.rel (0) target = $region45
    $region44: #{tpu_custom_call.1} parent=1 // pred_region
      _
    $region45: #{tpu_custom_call.1} parent=1 // pred_fallthru
      _
    %209 = vsyncpa [#allocation3], 1
    %210 = vsyncpa [#allocation5], 1

</llo_original>
